<compile_context>
chip_gen: v7x
topology: tpu7x:2x2x1
jax: 0.10.0
libtpu: 0.0.40
codegen_flags: <defaults>
</compile_context>

<pallas_src>
from functools import partial

import jax
import jax.numpy as jnp
from jax import lax
from jax.experimental import pallas as pl
from jax.experimental.pallas import tpu as pltpu

# ---- synthetic Phi config ---------------------------------------------------
CIN, COUT, KH, KW, STRIDE = 1, 8, 4, 4, 2
PHI_DIM = 64
HEAD_PAD = 128          # merged w_k|w_v head padded to a full 128-lane tile
MEM_TILE = 256          # expert-row tile when N is large (v7x 64 MiB VMEM friendly)
F32 = jnp.float32


def _vmem():
    return pl.BlockSpec(memory_space=pltpu.MemorySpace.VMEM)


# ---------------- Pallas kernels ---------------------------------------------
def _forward_kernel(xs_ref, xls_ref, cw_ref, cb_ref, fcw_ref, fcb_ref,
                    kvw_ref, kvb_ref, mem_ref, kn_ref, sg_ref,
                    g_ref, cs_ref, *, key_dim, value_dim, k_nn):
    kv_dim = key_dim + value_dim
    b = xs_ref.shape[0]

    # phi over the stacked batch [state; last_state]:
    # conv-as-matmul (+ReLU) -> fc (+ReLU) -> merged w_k|w_v head.
    imgs = jnp.concatenate([xs_ref[...], xls_ref[...]], axis=0)            # (2B, CHW)
    conv = jnp.maximum(
        jnp.dot(imgs, cw_ref[...], preferred_element_type=F32) + cb_ref[...], 0.0)
    phi = jnp.maximum(
        jnp.dot(conv, fcw_ref[...], preferred_element_type=F32) + fcb_ref[...], 0.0)
    kvb = kvb_ref[...]                                                      # (1, 128)
    kv = jnp.dot(phi, kvw_ref[...], preferred_element_type=F32) + kvb       # (2B, 128)

    x = kv[:b, :key_dim]                                                    # w_k(phi(state))
    # w_v(phi(last) - phi(state)) = w_v(phi_last) - w_v(phi_state) + b_v  (linearity)
    wv_diff = (kv[b:, key_dim:kv_dim] - kv[:b, key_dim:kv_dim]
               + kvb[:, key_dim:kv_dim])                                    # (B, Dv)

    mem = mem_ref[...]                                                      # (N, 128)
    mk = mem[:, :key_dim]
    mv = mem[:, key_dim:kv_dim]

    # alphas over ALL memory keys (row 0 also feeds the kNN distances).
    dims = (((1,), (1,)), ((), ()))
    alphas = lax.dot_general(x, mk, dims, preferred_element_type=F32)       # (B, N)

    # squared distance of sample-0 key to every memory key, up to the constant
    # ||x0||^2 (which does not change the ordering): ||k||^2 - 2 k.x0
    d = kn_ref[...] - 2.0 * alphas[0:1]                                     # (1, N)
    n_mem = d.shape[1]
    lane = lax.broadcasted_iota(jnp.int32, d.shape, 1)
    mask = jnp.zeros(d.shape, F32)
    for _ in range(k_nn):                                    # k is static -> unrolled
        m = jnp.min(d, axis=1, keepdims=True)
        first = jnp.min(jnp.where(d == m, lane, n_mem), axis=1, keepdims=True)
        sel = lane == first                                  # exactly one lane (ties -> lowest idx)
        mask = jnp.where(sel, 1.0, mask)
        d = jnp.where(sel, jnp.inf, d)

    # The reference kNN query only uses sample 0, so k_is/v_is are shared across
    # the batch and torch.bmm collapses to a masked 2-D matmul.
    g_hat = jnp.maximum(
        jnp.dot(alphas * mask, mv, preferred_element_type=F32), 0.0)        # (B, Dv)
    # g = g_hat / torch.norm(g_hat, p=2): single *global* L2 norm, no eps
    # (faithful to the reference, which also NaNs if g_hat is identically zero).
    g_ref[...] = g_hat * lax.rsqrt(jnp.sum(g_hat * g_hat, keepdims=True))

    # CosineSimilarity(dim=1, eps=1e-8) with per-norm clamping; reductions on
    # VPU/XLU (only a handful of elements), denominators via rsqrt on the EUP.
    s = sg_ref[...]
    dot = jnp.sum(wv_diff * s, axis=1, keepdims=True)                       # (B, 1)
    inv_na = jnp.minimum(
        lax.rsqrt(jnp.sum(wv_diff * wv_diff, axis=1, keepdims=True)), 1e8)
    inv_nb = jnp.minimum(lax.rsqrt(jnp.sum(s * s, axis=1, keepdims=True)), 1e8)
    cs_ref[...] = dot * inv_na * inv_nb


def _memory_kernel(xs_ref, xns_ref, cw_ref, cb_ref, fcw_ref, fcb_ref,
                   kvw_ref, kvb_ref, mem_ref, kn_ref, *, key_dim, value_dim):
    kv_dim = key_dim + value_dim
    n = xs_ref.shape[0]

    imgs = jnp.concatenate([xs_ref[...], xns_ref[...]], axis=0)             # (2TN, CHW)
    conv = jnp.maximum(
        jnp.dot(imgs, cw_ref[...], preferred_element_type=F32) + cb_ref[...], 0.0)
    phi = jnp.maximum(
        jnp.dot(conv, fcw_ref[...], preferred_element_type=F32) + fcb_ref[...], 0.0)
    kvb = kvb_ref[...]                                                       # (1, 128)
    kv = jnp.dot(phi, kvw_ref[...], preferred_element_type=F32) + kvb        # (2TN, 128)

    col = lax.broadcasted_iota(jnp.int32, (1, kv.shape[1]), 1)
    key_cols = (col < key_dim).astype(F32)
    val_cols = jnp.logical_and(col >= key_dim, col < kv_dim).astype(F32)

    kv_s, kv_ns = kv[:n], kv[n:]
    # key cols: w_k(phi(s)); value cols: w_v(phi(s) - phi(s')) (bias re-added via
    # linearity); padded cols stay zero.  Single unmasked full-lane store.
    mem_ref[...] = kv_s - val_cols * (kv_ns - kvb)

    # ||key_i||^2 emitted lane-dense as (1, TN) so forward() never recomputes it.
    keys2 = (kv_s * key_cols) ** 2
    dims = (((1,), (1,)), ((), ()))
    kn_ref[...] = lax.dot_general(jnp.ones((1, kv.shape[1]), F32), keys2, dims,
                                  preferred_element_type=F32)


# ---------------- parameters ---------------------------------------------------
def init_params(key, in_shape, key_dim, value_dim):
    c, h, w = in_shape
    oh = (h - KH) // STRIDE + 1
    ow = (w - KW) // STRIDE + 1
    ohw = oh * ow
    chw = c * h * w
    feat = ohw * COUT
    assert key_dim + value_dim <= HEAD_PAD
    ks = jax.random.split(key, 8)

    def u(k, shape, fan_in):
        bound = 1.0 / (fan_in ** 0.5)
        return jax.random.uniform(k, shape, F32, -bound, bound)

    conv_w = u(ks[0], (COUT, c, KH, KW), c * KH * KW)        # PyTorch OIHW
    conv_b = u(ks[1], (1, COUT), c * KH * KW)
    # Dense conv-as-matmul matrix: push the CHW pixel basis through the conv once
    # at init; columns laid out (oh, ow, cout) so no transpose is ever needed.
    basis = jnp.eye(chw, dtype=F32).reshape(chw, c, h, w)
    resp = lax.conv_general_dilated(basis, conv_w, (STRIDE, STRIDE), 'VALID')   # (chw, COUT, oh, ow)
    cw = resp.transpose(0, 2, 3, 1).reshape(chw, feat)
    cb = jnp.tile(conv_b, (1, ohw))                          # (1, feat) bias per (oh, ow, cout)

    fc_w = u(ks[2], (feat, PHI_DIM), feat)
    fc_b = u(ks[3], (1, PHI_DIM), feat)
    wk_w = u(ks[4], (PHI_DIM, key_dim), PHI_DIM)             # nn.Linear(64, key_dim)
    wk_b = u(ks[5], (1, key_dim), PHI_DIM)
    wv_w = u(ks[6], (PHI_DIM, value_dim), PHI_DIM)           # nn.Linear(64, value_dim)
    wv_b = u(ks[7], (1, value_dim), PHI_DIM)

    kvd = key_dim + value_dim
    # merged w_k|w_v head, zero-padded to 128 lanes (full-lane stores, one matmul).
    wkv_w = (jnp.zeros((PHI_DIM, HEAD_PAD), F32)
             .at[:, :key_dim].set(wk_w).at[:, key_dim:kvd].set(wv_w))
    wkv_b = (jnp.zeros((1, HEAD_PAD), F32)
             .at[:, :key_dim].set(wk_b).at[:, key_dim:kvd].set(wv_b))
    return {"cw": cw, "cb": cb, "fc_w": fc_w, "fc_b": fc_b,
            "wkv_w": wkv_w, "wkv_b": wkv_b,
            # kept for static key/value dim metadata in the wrappers
            "wk_b": wk_b, "wv_b": wv_b}


# ---------------- memory network (update_phi precompute) -----------------------
def build_memory(expert_states, expert_next_states, params):
    """One pallas_call: packed (N, 128) [keys|values|0] + (1, N) key norms."""
    n = expert_states.shape[0]
    key_dim = params["wk_b"].shape[1]
    value_dim = params["wv_b"].shape[1]
    xs = expert_states.reshape(n, -1)
    xns = expert_next_states.reshape(n, -1)
    chw = xs.shape[1]

    # Row-tile over experts: gridless-equivalent for small N, double-buffered and
    # megacore-parallel on v7x for large expert sets (tile is a multiple of 8/128).
    tn = n if n <= MEM_TILE else MEM_TILE
    grid = (pl.cdiv(n, tn),)
    row = lambda i: (i, 0)
    rep = lambda i: (0, 0)

    return pl.pallas_call(
        partial(_memory_kernel, key_dim=key_dim, value_dim=value_dim),
        out_shape=(jax.ShapeDtypeStruct((n, HEAD_PAD), F32),
                   jax.ShapeDtypeStruct((1, n), F32)),
        grid_spec=pltpu.PrefetchScalarGridSpec(
            num_scalar_prefetch=0,
            grid=grid,
            in_specs=[pl.BlockSpec((tn, chw), row),
                      pl.BlockSpec((tn, chw), row),
                      pl.BlockSpec(params["cw"].shape, rep),
                      pl.BlockSpec(params["cb"].shape, rep),
                      pl.BlockSpec(params["fc_w"].shape, rep),
                      pl.BlockSpec(params["fc_b"].shape, rep),
                      pl.BlockSpec(params["wkv_w"].shape, rep),
                      pl.BlockSpec(params["wkv_b"].shape, rep)],
            out_specs=(pl.BlockSpec((tn, HEAD_PAD), row),
                       pl.BlockSpec((1, tn), lambda i: (0, i)))),
        compiler_params=pltpu.CompilerParams(dimension_semantics=("parallel",)),
    )(xs, xns, params["cw"], params["cb"], params["fc_w"], params["fc_b"],
      params["wkv_w"], params["wkv_b"])


# ---------------- forward -------------------------------------------------------
def subgoal_extractor_forward(last_state, state, subgoal, params,
                              mem_kv, mem_knorm2, k):
    """Entire forward pass in a single gridless pallas_call (kNN done in-kernel)."""
    b = state.shape[0]
    key_dim = params["wk_b"].shape[1]
    value_dim = params["wv_b"].shape[1]
    xs = state.reshape(b, -1)
    xls = last_state.reshape(b, -1)
    n_mem = mem_kv.shape[0]
    chw = xs.shape[1]
    feat = params["cw"].shape[1]

    flops = 2 * (2 * b * chw * feat + 2 * b * feat * PHI_DIM
                 + 2 * b * PHI_DIM * HEAD_PAD
                 + b * key_dim * n_mem + b * n_mem * value_dim)
    nbytes = 4 * (2 * b * chw + params["cw"].size + params["fc_w"].size
                  + params["wkv_w"].size + mem_kv.size + n_mem
                  + subgoal.size + b * value_dim + b)

    g, cs = pl.pallas_call(
        partial(_forward_kernel, key_dim=key_dim, value_dim=value_dim, k_nn=k),
        out_shape=(jax.ShapeDtypeStruct((b, value_dim), F32),
                   jax.ShapeDtypeStruct((b, 1), F32)),
        in_specs=[_vmem() for _ in range(11)],
        out_specs=(_vmem(), _vmem()),
        cost_estimate=pl.CostEstimate(flops=flops, transcendentals=2 * b + 1,
                                      bytes_accessed=nbytes),
    )(xs, xls, params["cw"], params["cb"], params["fc_w"], params["fc_b"],
      params["wkv_w"], params["wkv_b"], mem_kv, mem_knorm2, subgoal)

    g = g.reshape(b, 1, value_dim)                 # (B, 1, value_dim) like torch
    return g, cs[:, 0]                             # guidance_reward: (B,)


if __name__ == "__main__":
    B, H, W = 2, 16, 16
    K_NN, KEY_DIM, VALUE_DIM, N_EXP = 5, 16, 8, 12

    root = jax.random.PRNGKey(0)
    kp, k1, k2, k3, k4, k5 = jax.random.split(root, 6)

    params = init_params(kp, (CIN, H, W), KEY_DIM, VALUE_DIM)

    last_state = jax.random.normal(k1, (B, CIN, H, W), F32)
    state = jax.random.normal(k2, (B, CIN, H, W), F32)
    subgoal = jax.random.normal(k3, (B, VALUE_DIM), F32)
    expert_states = jax.random.normal(k4, (N_EXP, CIN, H, W), F32)
    expert_next_states = jax.random.normal(k5, (N_EXP, CIN, H, W), F32)

    build = jax.jit(build_memory)
    fwd = jax.jit(subgoal_extractor_forward, static_argnums=(6,))

    mem_kv, mem_knorm2 = build(expert_states, expert_next_states, params)
    g, guidance_reward = fwd(last_state, state, subgoal, params,
                             mem_kv, mem_knorm2, K_NN)

    jax.block_until_ready((g, guidance_reward))
    assert g.shape == (B, 1, VALUE_DIM)
    assert guidance_reward.shape == (B,)
    print("KERNEL_OK")
</pallas_src>

<mosaic_0001>
module attributes {stable_mosaic.version = 11 : i64} {
  func.func @_memory_kernel(%arg0: i32, %arg1: memref<12x256xf32, #tpu.memory_space<vmem>>, %arg2: memref<12x256xf32, #tpu.memory_space<vmem>>, %arg3: memref<256x392xf32, #tpu.memory_space<vmem>>, %arg4: memref<1x392xf32, #tpu.memory_space<vmem>>, %arg5: memref<392x64xf32, #tpu.memory_space<vmem>>, %arg6: memref<1x64xf32, #tpu.memory_space<vmem>>, %arg7: memref<64x128xf32, #tpu.memory_space<vmem>>, %arg8: memref<1x128xf32, #tpu.memory_space<vmem>>, %arg9: memref<12x128xf32, #tpu.memory_space<vmem>>, %arg10: memref<1x12xf32, #tpu.memory_space<vmem>>) attributes {dimension_semantics = [#tpu.dimension_semantics<parallel>], iteration_bounds = array<i64: 1>, scalar_prefetch = 0 : i64, scratch_operands = 0 : i64, tpu.core_type = #tpu.core_type<tc>, window_params = [{transform_indices = @transform_0, window_bounds = array<i64: 12, 256>}, {transform_indices = @transform_1, window_bounds = array<i64: 12, 256>}, {pipeline_mode = #tpu.pipeline_mode<synchronous>, transform_indices = @transform_2, window_bounds = array<i64: 256, 392>}, {pipeline_mode = #tpu.pipeline_mode<synchronous>, transform_indices = @transform_3, window_bounds = array<i64: 1, 392>}, {pipeline_mode = #tpu.pipeline_mode<synchronous>, transform_indices = @transform_4, window_bounds = array<i64: 392, 64>}, {pipeline_mode = #tpu.pipeline_mode<synchronous>, transform_indices = @transform_5, window_bounds = array<i64: 1, 64>}, {pipeline_mode = #tpu.pipeline_mode<synchronous>, transform_indices = @transform_6, window_bounds = array<i64: 64, 128>}, {pipeline_mode = #tpu.pipeline_mode<synchronous>, transform_indices = @transform_7, window_bounds = array<i64: 1, 128>}, {transform_indices = @transform_8, window_bounds = array<i64: 12, 128>}, {transform_indices = @transform_9, window_bounds = array<i64: 1, 12>}]} {
    %c0 = arith.constant 0 : index
    %c0_0 = arith.constant 0 : index
    %0 = vector.load %arg1[%c0, %c0_0] : memref<12x256xf32, #tpu.memory_space<vmem>>, vector<12x256xf32>
    %c0_1 = arith.constant 0 : index
    %c0_2 = arith.constant 0 : index
    %1 = vector.load %arg2[%c0_1, %c0_2] : memref<12x256xf32, #tpu.memory_space<vmem>>, vector<12x256xf32>
    %2 = tpu.concatenate %0, %1 in 0 : vector<12x256xf32>, vector<12x256xf32> -> vector<24x256xf32>
    %c0_3 = arith.constant 0 : index
    %c0_4 = arith.constant 0 : index
    %3 = vector.load %arg3[%c0_3, %c0_4] : memref<256x392xf32, #tpu.memory_space<vmem>>, vector<256x392xf32>
    %cst = arith.constant dense<0.000000e+00> : vector<24x392xf32>
    %4 = tpu.matmul %2, %3, %cst {dimension_numbers = #tpu.dot_dimension_numbers<[1], [0], [0], [1], [0, 0, 1, 1], [], []>} : vector<24x256xf32>, vector<256x392xf32>, vector<24x392xf32> -> vector<24x392xf32>
    %c0_5 = arith.constant 0 : index
    %c0_6 = arith.constant 0 : index
    %5 = vector.load %arg4[%c0_5, %c0_6] : memref<1x392xf32, #tpu.memory_space<vmem>>, vector<1x392xf32>
    %6 = vector.broadcast %5 : vector<1x392xf32> to vector<24x392xf32>
    %7 = arith.addf %4, %6 : vector<24x392xf32>
    %cst_7 = arith.constant 0.000000e+00 : f32
    %8 = vector.broadcast %cst_7 : f32 to vector<24x392xf32>
    %9 = arith.maximumf %7, %8 : vector<24x392xf32>
    %c0_8 = arith.constant 0 : index
    %c0_9 = arith.constant 0 : index
    %10 = vector.load %arg5[%c0_8, %c0_9] : memref<392x64xf32, #tpu.memory_space<vmem>>, vector<392x64xf32>
    %cst_10 = arith.constant dense<0.000000e+00> : vector<24x64xf32>
    %11 = tpu.matmul %9, %10, %cst_10 {dimension_numbers = #tpu.dot_dimension_numbers<[1], [0], [0], [1], [0, 0, 1, 1], [], []>} : vector<24x392xf32>, vector<392x64xf32>, vector<24x64xf32> -> vector<24x64xf32>
    %c0_11 = arith.constant 0 : index
    %c0_12 = arith.constant 0 : index
    %12 = vector.load %arg6[%c0_11, %c0_12] : memref<1x64xf32, #tpu.memory_space<vmem>>, vector<1x64xf32>
    %13 = vector.broadcast %12 : vector<1x64xf32> to vector<24x64xf32>
    %14 = arith.addf %11, %13 : vector<24x64xf32>
    %cst_13 = arith.constant 0.000000e+00 : f32
    %15 = vector.broadcast %cst_13 : f32 to vector<24x64xf32>
    %16 = arith.maximumf %14, %15 : vector<24x64xf32>
    %c0_14 = arith.constant 0 : index
    %c0_15 = arith.constant 0 : index
    %17 = vector.load %arg8[%c0_14, %c0_15] : memref<1x128xf32, #tpu.memory_space<vmem>>, vector<1x128xf32>
    %c0_16 = arith.constant 0 : index
    %c0_17 = arith.constant 0 : index
    %18 = vector.load %arg7[%c0_16, %c0_17] : memref<64x128xf32, #tpu.memory_space<vmem>>, vector<64x128xf32>
    %cst_18 = arith.constant dense<0.000000e+00> : vector<24x128xf32>
    %19 = tpu.matmul %16, %18, %cst_18 {dimension_numbers = #tpu.dot_dimension_numbers<[1], [0], [0], [1], [0, 0, 1, 1], [], []>} : vector<24x64xf32>, vector<64x128xf32>, vector<24x128xf32> -> vector<24x128xf32>
    %20 = vector.broadcast %17 : vector<1x128xf32> to vector<24x128xf32>
    %21 = arith.addf %19, %20 : vector<24x128xf32>
    %22 = tpu.iota {dimensions = array<i32: 1>} : vector<1x128xi32>
    %c16_i32 = arith.constant 16 : i32
    %23 = vector.broadcast %c16_i32 : i32 to vector<1x128xi32>
    %24 = arith.cmpi slt, %22, %23 : vector<1x128xi32>
    %25 = arith.extui %24 : vector<1x128xi1> to vector<1x128xi32>
    %26 = arith.sitofp %25 : vector<1x128xi32> to vector<1x128xf32>
    %c16_i32_19 = arith.constant 16 : i32
    %27 = vector.broadcast %c16_i32_19 : i32 to vector<1x128xi32>
    %28 = arith.cmpi sge, %22, %27 : vector<1x128xi32>
    %c24_i32 = arith.constant 24 : i32
    %29 = vector.broadcast %c24_i32 : i32 to vector<1x128xi32>
    %30 = arith.cmpi slt, %22, %29 : vector<1x128xi32>
    %31 = arith.andi %28, %30 : vector<1x128xi1>
    %32 = arith.extui %31 : vector<1x128xi1> to vector<1x128xi32>
    %33 = arith.sitofp %32 : vector<1x128xi32> to vector<1x128xf32>
    %34 = vector.extract_strided_slice %21 {offsets = [0, 0], sizes = [12, 128], strides = [1, 1]} : vector<24x128xf32> to vector<12x128xf32>
    %35 = vector.extract_strided_slice %21 {offsets = [12, 0], sizes = [12, 128], strides = [1, 1]} : vector<24x128xf32> to vector<12x128xf32>
    %36 = vector.broadcast %17 : vector<1x128xf32> to vector<12x128xf32>
    %37 = arith.subf %35, %36 : vector<12x128xf32>
    %38 = vector.broadcast %33 : vector<1x128xf32> to vector<12x128xf32>
    %39 = arith.mulf %38, %37 : vector<12x128xf32>
    %40 = arith.subf %34, %39 : vector<12x128xf32>
    %c0_20 = arith.constant 0 : index
    %c0_21 = arith.constant 0 : index
    %41 = vector.load %arg9[%c0_20, %c0_21] : memref<12x128xf32, #tpu.memory_space<vmem>>, vector<12x128xf32>
    tpu.vector_store %arg9[%c0_20, %c0_21], %40 {strides = array<i32>} : memref<12x128xf32, #tpu.memory_space<vmem>>, vector<12x128xf32>,
    %42 = vector.broadcast %26 : vector<1x128xf32> to vector<12x128xf32>
    %43 = arith.mulf %34, %42 : vector<12x128xf32>
    %44 = arith.mulf %43, %43 : vector<12x128xf32>
    %cst_22 = arith.constant 1.000000e+00 : f32
    %45 = vector.broadcast %cst_22 : f32 to vector<1x128xf32>
    %cst_23 = arith.constant dense<0.000000e+00> : vector<1x12xf32>
    %46 = tpu.matmul %45, %44, %cst_23 {dimension_numbers = #tpu.dot_dimension_numbers<[1], [1], [0], [0], [0, 0, 1, 0], [], []>} : vector<1x128xf32>, vector<12x128xf32>, vector<1x12xf32> -> vector<1x12xf32>
    %c0_24 = arith.constant 0 : index
    %c0_25 = arith.constant 0 : index
    %47 = vector.load %arg10[%c0_24, %c0_25] : memref<1x12xf32, #tpu.memory_space<vmem>>, vector<1x12xf32>
    tpu.vector_store %arg10[%c0_24, %c0_25], %46 {strides = array<i32>} : memref<1x12xf32, #tpu.memory_space<vmem>>, vector<1x12xf32>,
    return
  }
  func.func @transform_0(%arg0: i32) -> (i32, i32) {
    %c0_i32 = arith.constant 0 : i32
    %c0_i32_0 = arith.constant 0 : i32
    return %arg0, %c0_i32 : i32, i32
  }
  func.func @transform_1(%arg0: i32) -> (i32, i32) {
    %c0_i32 = arith.constant 0 : i32
    %c0_i32_0 = arith.constant 0 : i32
    return %arg0, %c0_i32 : i32, i32
  }
  func.func @transform_2(%arg0: i32) -> (i32, i32) {
    %c0_i32 = arith.constant 0 : i32
    %c0_i32_0 = arith.constant 0 : i32
    %c0_i32_1 = arith.constant 0 : i32
    return %c0_i32, %c0_i32_0 : i32, i32
  }
  func.func @transform_3(%arg0: i32) -> (i32, i32) {
    %c0_i32 = arith.constant 0 : i32
    %c0_i32_0 = arith.constant 0 : i32
    %c0_i32_1 = arith.constant 0 : i32
    return %c0_i32, %c0_i32_0 : i32, i32
  }
  func.func @transform_4(%arg0: i32) -> (i32, i32) {
    %c0_i32 = arith.constant 0 : i32
    %c0_i32_0 = arith.constant 0 : i32
    %c0_i32_1 = arith.constant 0 : i32
    return %c0_i32, %c0_i32_0 : i32, i32
  }
  func.func @transform_5(%arg0: i32) -> (i32, i32) {
    %c0_i32 = arith.constant 0 : i32
    %c0_i32_0 = arith.constant 0 : i32
    %c0_i32_1 = arith.constant 0 : i32
    return %c0_i32, %c0_i32_0 : i32, i32
  }
  func.func @transform_6(%arg0: i32) -> (i32, i32) {
    %c0_i32 = arith.constant 0 : i32
    %c0_i32_0 = arith.constant 0 : i32
    %c0_i32_1 = arith.constant 0 : i32
    return %c0_i32, %c0_i32_0 : i32, i32
  }
  func.func @transform_7(%arg0: i32) -> (i32, i32) {
    %c0_i32 = arith.constant 0 : i32
    %c0_i32_0 = arith.constant 0 : i32
    %c0_i32_1 = arith.constant 0 : i32
    return %c0_i32, %c0_i32_0 : i32, i32
  }
  func.func @transform_8(%arg0: i32) -> (i32, i32) {
    %c0_i32 = arith.constant 0 : i32
    %c0_i32_0 = arith.constant 0 : i32
    return %arg0, %c0_i32 : i32, i32
  }
  func.func @transform_9(%arg0: i32) -> (i32, i32) {
    %c0_i32 = arith.constant 0 : i32
    %c0_i32_0 = arith.constant 0 : i32
    return %c0_i32, %arg0 : i32, i32
  }
}

</mosaic_0001>

<llo_original>
// kernel: build_memory.1
$region0: #{build_memory.1}
  #allocation0 [shape = 'u32[]', space=smem, size = 0x4, offset = 0x4, fixed_abs, tag = 'smem constant byte address 0x4 - core index']
  #allocation1 [shape = 'u32[144,128]{1,0:T(1,128)}', space=vmem, size = 0x12000, scoped, tag = 'internal scratch']
  %s0 = inlined_call_operand.vmem [shape: f32[12,256], index: 0, kind: input, shape index: {}]
  %s1 = inlined_call_operand.vmem [shape: f32[12,256], index: 1, kind: input, shape index: {}]
  %s2 = inlined_call_operand.vmem [shape: f32[256,392], index: 2, kind: input, shape index: {}]
  %s3 = inlined_call_operand.vmem [shape: f32[1,392], index: 3, kind: input, shape index: {}]
  %s4 = inlined_call_operand.vmem [shape: f32[392,64], index: 4, kind: input, shape index: {}]
  %s5 = inlined_call_operand.vmem [shape: f32[1,64], index: 5, kind: input, shape index: {}]
  %s6 = inlined_call_operand.vmem [shape: f32[64,128], index: 6, kind: input, shape index: {}]
  %s7 = inlined_call_operand.vmem [shape: f32[1,128], index: 7, kind: input, shape index: {}]
  %s8 = inlined_call_operand.hbm [shape: f32[12,128], index: 8, kind: output, shape index: {0}]
  %s9 = inlined_call_operand.hbm [shape: f32[1,12], index: 9, kind: output, shape index: {1}]
  %10 = xla_tuple %s8, %s9
  %s11 = sld [smem:[#allocation0]]
  $region50: #{build_memory.1} parent=0
    _
  %s13 = ssub.s32 1, %s11
  %s14 = scalar_select 0, %s13, %s11
  $region1: #{build_memory.1} parent=0
    #allocation2 [shape = 'u8[8192]{0}', space=vmem, size = 0x2000, scoped, tag = 'output window, operand 0, single buffered']
    #allocation3 [shape = 's32[1]{0}', space=sflag, size = 0x4, scoped, tag = 'scoped memory for build_memory.1']
    #allocation4 [shape = 'u8[512]{0}', space=vmem, size = 0x400, scoped, tag = 'output window, operand 1, single buffered']
    #allocation5 [shape = 's32[1]{0}', space=sflag, size = 0x4, scoped, tag = 'scoped memory for build_memory.1']
    %15 = vsyncpa [#allocation3], 0
    %16 = vsyncpa [#allocation5], 0
    // Predicated region
    $region2: #{build_memory.1} parent=1 // pred_check
      _
    $region3: #{build_memory.1} parent=1 // pred_check_branch
      %18 = sbr.rel (0) target = $region5
    $region4: #{build_memory.1} parent=1 // pred_region
      _
    $region5: #{build_memory.1} parent=1 // pred_fallthru
      _
    // Predicated region
    $region6: #{build_memory.1} parent=1 // pred_check
      _
    $region7: #{build_memory.1} parent=1 // pred_check_branch
      %20 = sbr.rel (0) target = $region9
    $region8: #{build_memory.1} parent=1 // pred_region
      _
    $region9: #{build_memory.1} parent=1 // pred_fallthru
      _
    // Predicated region
    $region10: #{build_memory.1} parent=1 // pred_check
      _
    $region11: #{build_memory.1} parent=1 // pred_check_branch
      %22 = sbr.rel (0) target = $region13
    $region12: #{build_memory.1} parent=1 // pred_region
      _
    $region13: #{build_memory.1} parent=1 // pred_fallthru
      _
    // Predicated region
    $region14: #{build_memory.1} parent=1 // pred_check
      _
    $region15: #{build_memory.1} parent=1 // pred_check_branch
      %24 = sbr.rel (0) target = $region17
    $region16: #{build_memory.1} parent=1 // pred_region
      _
    $region17: #{build_memory.1} parent=1 // pred_fallthru
      _
    // Predicated region
    $region18: #{build_memory.1} parent=1 // pred_check
      _
    $region19: #{build_memory.1} parent=1 // pred_check_branch
      %26 = sbr.rel (0) target = $region21
    $region20: #{build_memory.1} parent=1 // pred_region
      _
    $region21: #{build_memory.1} parent=1 // pred_fallthru
      _
    // Predicated region
    $region22: #{build_memory.1} parent=1 // pred_check
      _
    $region23: #{build_memory.1} parent=1 // pred_check_branch
      %28 = sbr.rel (0) target = $region25
    $region24: #{build_memory.1} parent=1 // pred_region
      _
    $region25: #{build_memory.1} parent=1 // pred_fallthru
      _
    // Predicated region
    $region26: #{build_memory.1} parent=1 // pred_check
      _
    $region27: #{build_memory.1} parent=1 // pred_check_branch
      %30 = sbr.rel (0) target = $region29
    $region28: #{build_memory.1} parent=1 // pred_region
      _
    $region29: #{build_memory.1} parent=1 // pred_fallthru
      _
    // Predicated region
    $region30: #{build_memory.1} parent=1 // pred_check
      _
    $region31: #{build_memory.1} parent=1 // pred_check_branch
      %32 = sbr.rel (0) target = $region33
    $region32: #{build_memory.1} parent=1 // pred_region
      _
    $region33: #{build_memory.1} parent=1 // pred_fallthru
      _
    %v33 = vld [vmem:[%s0] sm:$0xff]
    %v34 = vld [vmem:[%s0 + $0x8] sm:$0xff]
    %v35 = vld [vmem:[%s0 + $0x10] sm:$0xf]
    %v36 = vld [vmem:[%s0 + $0x18] sm:$0xf]
    %v37 = vld [vmem:[%s1] sm:$0xff]
    %v38 = vld [vmem:[%s1 + $0x8] sm:$0xff]
    %v39 = vld [vmem:[%s1 + $0x10] sm:$0xf]
    %v40 = vld [vmem:[%s1 + $0x18] sm:$0xf]
    %vm45 = vcmask 1043456
    %v46 = vrot.slane %v37, 4
    %v47 = vrot.slane %v38, 4
    %v48 = vrot.slane %v39, 4
    %v49 = vsel %vm45, %v46, %v48
    %v50 = vrot.slane %v40, 4
    %v51 = vsel %vm45, %v47, %v50
    %v56 = vsel %vm45, %v35, %v46
    %v57 = vsel %vm45, %v36, %v47
    %v58 = vld [vmem:[%s2] sm:$0xff]
    %v59 = vld [vmem:[%s2 + $0x8] sm:$0xff]
    %v60 = vld [vmem:[%s2 + $0x10] sm:$0xff]
    %v61 = vld [vmem:[%s2 + $0x18] sm:$0xff]
    %v62 = vld [vmem:[%s2 + $0x20] sm:$0xff]
    %v63 = vld [vmem:[%s2 + $0x28] sm:$0xff]
    %v64 = vld [vmem:[%s2 + $0x30] sm:$0xff]
    %v65 = vld [vmem:[%s2 + $0x38] sm:$0xff]
    %v66 = vld [vmem:[%s2 + $0x40] sm:$0xff]
    %v67 = vld [vmem:[%s2 + $0x48] sm:$0xff]
    %v68 = vld [vmem:[%s2 + $0x50] sm:$0xff]
    %v69 = vld [vmem:[%s2 + $0x58] sm:$0xff]
    %v70 = vld [vmem:[%s2 + $0x60] sm:$0xff]
    %v71 = vld [vmem:[%s2 + $0x68] sm:$0xff]
    %v72 = vld [vmem:[%s2 + $0x70] sm:$0xff]
    %v73 = vld [vmem:[%s2 + $0x78] sm:$0xff]
    %v74 = vld [vmem:[%s2 + $0x80] sm:$0xff]
    %v75 = vld [vmem:[%s2 + $0x88] sm:$0xff]
    %v76 = vld [vmem:[%s2 + $0x90] sm:$0xff]
    %v77 = vld [vmem:[%s2 + $0x98] sm:$0xff]
    %v78 = vld [vmem:[%s2 + $0xa0] sm:$0xff]
    %v79 = vld [vmem:[%s2 + $0xa8] sm:$0xff]
    %v80 = vld [vmem:[%s2 + $0xb0] sm:$0xff]
    %v81 = vld [vmem:[%s2 + $0xb8] sm:$0xff]
    %v82 = vld [vmem:[%s2 + $0xc0] sm:$0xff]
    %v83 = vld [vmem:[%s2 + $0xc8] sm:$0xff]
    %v84 = vld [vmem:[%s2 + $0xd0] sm:$0xff]
    %v85 = vld [vmem:[%s2 + $0xd8] sm:$0xff]
    %v86 = vld [vmem:[%s2 + $0xe0] sm:$0xff]
    %v87 = vld [vmem:[%s2 + $0xe8] sm:$0xff]
    %v88 = vld [vmem:[%s2 + $0xf0] sm:$0xff]
    %v89 = vld [vmem:[%s2 + $0xf8] sm:$0xff]
    %v90 = vld [vmem:[%s2 + $0x100] sm:$0xff]
    %v91 = vld [vmem:[%s2 + $0x108] sm:$0xff]
    %v92 = vld [vmem:[%s2 + $0x110] sm:$0xff]
    %v93 = vld [vmem:[%s2 + $0x118] sm:$0xff]
    %v94 = vld [vmem:[%s2 + $0x120] sm:$0xff]
    %v95 = vld [vmem:[%s2 + $0x128] sm:$0xff]
    %v96 = vld [vmem:[%s2 + $0x130] sm:$0xff]
    %v97 = vld [vmem:[%s2 + $0x138] sm:$0xff]
    %v98 = vld [vmem:[%s2 + $0x140] sm:$0xff]
    %v99 = vld [vmem:[%s2 + $0x148] sm:$0xff]
    %v100 = vld [vmem:[%s2 + $0x150] sm:$0xff]
    %v101 = vld [vmem:[%s2 + $0x158] sm:$0xff]
    %v102 = vld [vmem:[%s2 + $0x160] sm:$0xff]
    %v103 = vld [vmem:[%s2 + $0x168] sm:$0xff]
    %v104 = vld [vmem:[%s2 + $0x170] sm:$0xff]
    %v105 = vld [vmem:[%s2 + $0x178] sm:$0xff]
    %v106 = vld [vmem:[%s2 + $0x180] sm:$0xff]
    %v107 = vld [vmem:[%s2 + $0x188] sm:$0xff]
    %v108 = vld [vmem:[%s2 + $0x190] sm:$0xff]
    %v109 = vld [vmem:[%s2 + $0x198] sm:$0xff]
    %v110 = vld [vmem:[%s2 + $0x1a0] sm:$0xff]
    %v111 = vld [vmem:[%s2 + $0x1a8] sm:$0xff]
    %v112 = vld [vmem:[%s2 + $0x1b0] sm:$0xff]
    %v113 = vld [vmem:[%s2 + $0x1b8] sm:$0xff]
    %v114 = vld [vmem:[%s2 + $0x1c0] sm:$0xff]
    %v115 = vld [vmem:[%s2 + $0x1c8] sm:$0xff]
    %v116 = vld [vmem:[%s2 + $0x1d0] sm:$0xff]
    %v117 = vld [vmem:[%s2 + $0x1d8] sm:$0xff]
    %v118 = vld [vmem:[%s2 + $0x1e0] sm:$0xff]
    %v119 = vld [vmem:[%s2 + $0x1e8] sm:$0xff]
    %v120 = vld [vmem:[%s2 + $0x1f0] sm:$0xff]
    %v121 = vld [vmem:[%s2 + $0x1f8] sm:$0xff]
    %v122 = vld [vmem:[%s2 + $0x200] sm:$0xff]
    %v123 = vld [vmem:[%s2 + $0x208] sm:$0xff]
    %v124 = vld [vmem:[%s2 + $0x210] sm:$0xff]
    %v125 = vld [vmem:[%s2 + $0x218] sm:$0xff]
    %v126 = vld [vmem:[%s2 + $0x220] sm:$0xff]
    %v127 = vld [vmem:[%s2 + $0x228] sm:$0xff]
    %v128 = vld [vmem:[%s2 + $0x230] sm:$0xff]
    %v129 = vld [vmem:[%s2 + $0x238] sm:$0xff]
    %v130 = vld [vmem:[%s2 + $0x240] sm:$0xff]
    %v131 = vld [vmem:[%s2 + $0x248] sm:$0xff]
    %v132 = vld [vmem:[%s2 + $0x250] sm:$0xff]
    %v133 = vld [vmem:[%s2 + $0x258] sm:$0xff]
    %v134 = vld [vmem:[%s2 + $0x260] sm:$0xff]
    %v135 = vld [vmem:[%s2 + $0x268] sm:$0xff]
    %v136 = vld [vmem:[%s2 + $0x270] sm:$0xff]
    %v137 = vld [vmem:[%s2 + $0x278] sm:$0xff]
    %v138 = vld [vmem:[%s2 + $0x280] sm:$0xff]
    %v139 = vld [vmem:[%s2 + $0x288] sm:$0xff]
    %v140 = vld [vmem:[%s2 + $0x290] sm:$0xff]
    %v141 = vld [vmem:[%s2 + $0x298] sm:$0xff]
    %v142 = vld [vmem:[%s2 + $0x2a0] sm:$0xff]
    %v143 = vld [vmem:[%s2 + $0x2a8] sm:$0xff]
    %v144 = vld [vmem:[%s2 + $0x2b0] sm:$0xff]
    %v145 = vld [vmem:[%s2 + $0x2b8] sm:$0xff]
    %v146 = vld [vmem:[%s2 + $0x2c0] sm:$0xff]
    %v147 = vld [vmem:[%s2 + $0x2c8] sm:$0xff]
    %v148 = vld [vmem:[%s2 + $0x2d0] sm:$0xff]
    %v149 = vld [vmem:[%s2 + $0x2d8] sm:$0xff]
    %v150 = vld [vmem:[%s2 + $0x2e0] sm:$0xff]
    %v151 = vld [vmem:[%s2 + $0x2e8] sm:$0xff]
    %v152 = vld [vmem:[%s2 + $0x2f0] sm:$0xff]
    %v153 = vld [vmem:[%s2 + $0x2f8] sm:$0xff]
    %v154 = vld [vmem:[%s2 + $0x300] sm:$0xff]
    %v155 = vld [vmem:[%s2 + $0x308] sm:$0xff]
    %v156 = vld [vmem:[%s2 + $0x310] sm:$0xff]
    %v157 = vld [vmem:[%s2 + $0x318] sm:$0xff]
    %v158 = vld [vmem:[%s2 + $0x320] sm:$0xff]
    %v159 = vld [vmem:[%s2 + $0x328] sm:$0xff]
    %v160 = vld [vmem:[%s2 + $0x330] sm:$0xff]
    %v161 = vld [vmem:[%s2 + $0x338] sm:$0xff]
    %v162 = vld [vmem:[%s2 + $0x340] sm:$0xff]
    %v163 = vld [vmem:[%s2 + $0x348] sm:$0xff]
    %v164 = vld [vmem:[%s2 + $0x350] sm:$0xff]
    %v165 = vld [vmem:[%s2 + $0x358] sm:$0xff]
    %v166 = vld [vmem:[%s2 + $0x360] sm:$0xff]
    %v167 = vld [vmem:[%s2 + $0x368] sm:$0xff]
    %v168 = vld [vmem:[%s2 + $0x370] sm:$0xff]
    %v169 = vld [vmem:[%s2 + $0x378] sm:$0xff]
    %v170 = vld [vmem:[%s2 + $0x380] sm:$0xff]
    %v171 = vld [vmem:[%s2 + $0x388] sm:$0xff]
    %v172 = vld [vmem:[%s2 + $0x390] sm:$0xff]
    %v173 = vld [vmem:[%s2 + $0x398] sm:$0xff]
    %v174 = vld [vmem:[%s2 + $0x3a0] sm:$0xff]
    %v175 = vld [vmem:[%s2 + $0x3a8] sm:$0xff]
    %v176 = vld [vmem:[%s2 + $0x3b0] sm:$0xff]
    %v177 = vld [vmem:[%s2 + $0x3b8] sm:$0xff]
    %v178 = vld [vmem:[%s2 + $0x3c0] sm:$0xff]
    %v179 = vld [vmem:[%s2 + $0x3c8] sm:$0xff]
    %v180 = vld [vmem:[%s2 + $0x3d0] sm:$0xff]
    %v181 = vld [vmem:[%s2 + $0x3d8] sm:$0xff]
    %v182 = vld [vmem:[%s2 + $0x3e0] sm:$0xff]
    %v183 = vld [vmem:[%s2 + $0x3e8] sm:$0xff]
    %v184 = vld [vmem:[%s2 + $0x3f0] sm:$0xff]
    %v185 = vld [vmem:[%s2 + $0x3f8] sm:$0xff]
    %v186 = vld [vmem:[%s3] sm:$0xf]
    %v188 = vlaneseq
    %v189 = vshrl.u32 %v188, 7
    %v190 = vsub.s32 0, %v189
    %v191 = vrot.slane %v186, %v190
    %v192 = vlaneseq
    %v193 = vshrl.u32 %v192, 7
    %v194 = vsub.s32 1, %v193
    %v195 = vrot.slane %v186, %v194
    %v196 = vlaneseq
    %v197 = vshrl.u32 %v196, 7
    %v198 = vsub.s32 2, %v197
    %v199 = vrot.slane %v186, %v198
    %v200 = vlaneseq
    %v201 = vshrl.u32 %v200, 7
    %v202 = vsub.s32 3, %v201
    %v203 = vrot.slane %v186, %v202
    %208 = vmatprep.subr.mxu0 %v59
    %209 = vmatpush1.msra.mxu0 %v58
    %210 = vmatprep.subr.mxu0 %v63
    %211 = vmatpush1.msra.mxu0 %v62
    %212 = vmatprep.subr.mxu0 %v67
    %213 = vmatpush1.msra.mxu0 %v66
    %214 = vmatprep.subr.mxu0 %v71
    %215 = vmatpush1.msra.mxu0 %v70
    %216 = vmatprep.subr.mxu0 %v75
    %217 = vmatpush1.msra.mxu0 %v74
    %218 = vmatprep.subr.mxu0 %v79
    %219 = vmatpush1.msra.mxu0 %v78
    %220 = vmatprep.subr.mxu0 %v83
    %221 = vmatpush1.msra.mxu0 %v82
    %222 = vmatprep.subr.mxu0 %v87
    %223 = vmatpush1.msra.mxu0 %v86
    %224 = vmatprep.subr.mxu0 %v91
    %225 = vmatpush1.msra.mxu0 %v90
    %226 = vmatprep.subr.mxu0 %v95
    %227 = vmatpush1.msra.mxu0 %v94
    %228 = vmatprep.subr.mxu0 %v99
    %229 = vmatpush1.msra.mxu0 %v98
    %230 = vmatprep.subr.mxu0 %v103
    %231 = vmatpush1.msra.mxu0 %v102
    %232 = vmatprep.subr.mxu0 %v107
    %233 = vmatpush1.msra.mxu0 %v106
    %234 = vmatprep.subr.mxu0 %v111
    %235 = vmatpush1.msra.mxu0 %v110
    %236 = vmatprep.subr.mxu0 %v115
    %237 = vmatpush1.msra.mxu0 %v114
    %238 = vmatprep.subr.mxu0 %v119
    %239 = vmatpush1.msra.mxu0 %v118
    %240 = vmatprep.subr.mxu0 %v123
    %241 = vmatpush1.msra.mxu0 %v122
    %242 = vmatprep.subr.mxu0 %v127
    %243 = vmatpush1.msra.mxu0 %v126
    %244 = vmatprep.subr.mxu0 %v131
    %245 = vmatpush1.msra.mxu0 %v130
    %246 = vmatprep.subr.mxu0 %v135
    %247 = vmatpush1.msra.mxu0 %v134
    %248 = vmatprep.subr.mxu0 %v139
    %249 = vmatpush1.msra.mxu0 %v138
    %250 = vmatprep.subr.mxu0 %v143
    %251 = vmatpush1.msra.mxu0 %v142
    %252 = vmatprep.subr.mxu0 %v147
    %253 = vmatpush1.msra.mxu0 %v146
    %254 = vmatprep.subr.mxu0 %v151
    %255 = vmatpush1.msra.mxu0 %v150
    %256 = vmatprep.subr.mxu0 %v155
    %257 = vmatpush1.msra.mxu0 %v154
    %258 = vmatprep.subr.mxu0 %v159
    %259 = vmatpush1.msra.mxu0 %v158
    %260 = vmatprep.subr.mxu0 %v163
    %261 = vmatpush1.msra.mxu0 %v162
    %262 = vmatprep.subr.mxu0 %v167
    %263 = vmatpush1.msra.mxu0 %v166
    %264 = vmatprep.subr.mxu0 %v171
    %265 = vmatpush1.msra.mxu0 %v170
    %266 = vmatprep.subr.mxu0 %v175
    %267 = vmatpush1.msra.mxu0 %v174
    %268 = vmatprep.subr.mxu0 %v179
    %269 = vmatpush1.msra.mxu0 %v178
    %270 = vmatprep.subr.mxu0 %v183
    %271 = vmatpush1.msra.mxu0 %v182
    %272 = vmatprep.mubr.f32.mxu0 %v34
    %273 = vmatmul.mubr.f32.gmra.mrb[0].mxu0 %v33
    %v274 = vpop.f32.mrb[0].mxu0
    %v275 = vadd.f32 %v191, %v274
    %v276 = vpop.f32.mrb[0].mxu0
    %v277 = vadd.f32 %v195, %v276
    %278 = vmatprep.mubr.f32.mxu0 %v57
    %279 = vmatmul.mubr.f32.gmra.mrb[0].mxu0 %v56
    %v280 = vpop.f32.mrb[0].mxu0
    %v281 = vadd.f32 %v191, %v280
    %v282 = vpop.f32.mrb[0].mxu0
    %v283 = vadd.f32 %v195, %v282
    %284 = vmatprep.mubr.f32.mxu0 %v51
    %285 = vmatmul.mubr.f32.gmra.mrb[0].mxu0 %v49
    %v286 = vpop.f32.mrb[0].mxu0
    %v287 = vadd.f32 %v191, %v286
    %v288 = vpop.f32.mrb[0].mxu0
    %v289 = vadd.f32 %v195, %v288
    %290 = vdwg.mxu0
    %291 = vmatprep.subr.mxu0 %v61
    %292 = vmatpush1.msra.mxu0 %v60
    %293 = vmatprep.subr.mxu0 %v65
    %294 = vmatpush1.msra.mxu0 %v64
    %295 = vmatprep.subr.mxu0 %v69
    %296 = vmatpush1.msra.mxu0 %v68
    %297 = vmatprep.subr.mxu0 %v73
    %298 = vmatpush1.msra.mxu0 %v72
    %299 = vmatprep.subr.mxu0 %v77
    %300 = vmatpush1.msra.mxu0 %v76
    %301 = vmatprep.subr.mxu0 %v81
    %302 = vmatpush1.msra.mxu0 %v80
    %303 = vmatprep.subr.mxu0 %v85
    %304 = vmatpush1.msra.mxu0 %v84
    %305 = vmatprep.subr.mxu0 %v89
    %306 = vmatpush1.msra.mxu0 %v88
    %307 = vmatprep.subr.mxu0 %v93
    %308 = vmatpush1.msra.mxu0 %v92
    %309 = vmatprep.subr.mxu0 %v97
    %310 = vmatpush1.msra.mxu0 %v96
    %311 = vmatprep.subr.mxu0 %v101
    %312 = vmatpush1.msra.mxu0 %v100
    %313 = vmatprep.subr.mxu0 %v105
    %314 = vmatpush1.msra.mxu0 %v104
    %315 = vmatprep.subr.mxu0 %v109
    %316 = vmatpush1.msra.mxu0 %v108
    %317 = vmatprep.subr.mxu0 %v113
    %318 = vmatpush1.msra.mxu0 %v112
    %319 = vmatprep.subr.mxu0 %v117
    %320 = vmatpush1.msra.mxu0 %v116
    %321 = vmatprep.subr.mxu0 %v121
    %322 = vmatpush1.msra.mxu0 %v120
    %323 = vmatprep.subr.mxu0 %v125
    %324 = vmatpush1.msra.mxu0 %v124
    %325 = vmatprep.subr.mxu0 %v129
    %326 = vmatpush1.msra.mxu0 %v128
    %327 = vmatprep.subr.mxu0 %v133
    %328 = vmatpush1.msra.mxu0 %v132
    %329 = vmatprep.subr.mxu0 %v137
    %330 = vmatpush1.msra.mxu0 %v136
    %331 = vmatprep.subr.mxu0 %v141
    %332 = vmatpush1.msra.mxu0 %v140
    %333 = vmatprep.subr.mxu0 %v145
    %334 = vmatpush1.msra.mxu0 %v144
    %335 = vmatprep.subr.mxu0 %v149
    %336 = vmatpush1.msra.mxu0 %v148
    %337 = vmatprep.subr.mxu0 %v153
    %338 = vmatpush1.msra.mxu0 %v152
    %339 = vmatprep.subr.mxu0 %v157
    %340 = vmatpush1.msra.mxu0 %v156
    %341 = vmatprep.subr.mxu0 %v161
    %342 = vmatpush1.msra.mxu0 %v160
    %343 = vmatprep.subr.mxu0 %v165
    %344 = vmatpush1.msra.mxu0 %v164
    %345 = vmatprep.subr.mxu0 %v169
    %346 = vmatpush1.msra.mxu0 %v168
    %347 = vmatprep.subr.mxu0 %v173
    %348 = vmatpush1.msra.mxu0 %v172
    %349 = vmatprep.subr.mxu0 %v177
    %350 = vmatpush1.msra.mxu0 %v176
    %351 = vmatprep.subr.mxu0 %v181
    %352 = vmatpush1.msra.mxu0 %v180
    %353 = vmatprep.subr.mxu0 %v185
    %354 = vmatpush1.msra.mxu0 %v184
    %355 = vmatprep.mubr.f32.mxu0 %v34
    %356 = vmatmul.mubr.f32.gmra.mrb[0].mxu0 %v33
    %v357 = vpop.f32.mrb[0].mxu0
    %v358 = vadd.f32 %v199, %v357
    %v359 = vpop.f32.mrb[0].mxu0
    %v360 = vadd.f32 %v203, %v359
    %361 = vmatprep.mubr.f32.mxu0 %v57
    %362 = vmatmul.mubr.f32.gmra.mrb[0].mxu0 %v56
    %v363 = vpop.f32.mrb[0].mxu0
    %v364 = vadd.f32 %v199, %v363
    %v365 = vpop.f32.mrb[0].mxu0
    %v366 = vadd.f32 %v203, %v365
    %367 = vmatprep.mubr.f32.mxu0 %v51
    %368 = vmatmul.mubr.f32.gmra.mrb[0].mxu0 %v49
    %v369 = vpop.f32.mrb[0].mxu0
    %v370 = vadd.f32 %v199, %v369
    %v371 = vpop.f32.mrb[0].mxu0
    %v372 = vadd.f32 %v203, %v371
    %373 = vdwg.mxu0
    %v374 = vmax.f32 %v275, 0.0
    %v375 = vmax.f32 %v277, 0.0
    %v376 = vmax.f32 %v358, 0.0
    %v377 = vmax.f32 %v360, 0.0
    %v378 = vmax.f32 %v281, 0.0
    %v379 = vmax.f32 %v283, 0.0
    %v380 = vmax.f32 %v364, 0.0
    %v381 = vmax.f32 %v366, 0.0
    %v382 = vmax.f32 %v287, 0.0
    %v383 = vmax.f32 %v289, 0.0
    %v384 = vmax.f32 %v370, 0.0
    %v385 = vmax.f32 %v372, 0.0
    %v386 = vld [vmem:[%s4] sm:$0xff]
    %v387 = vld [vmem:[%s4 + $0x8] sm:$0xff]
    %v388 = vld [vmem:[%s4 + $0x10] sm:$0xff]
    %v389 = vld [vmem:[%s4 + $0x18] sm:$0xff]
    %v390 = vld [vmem:[%s4 + $0x20] sm:$0xff]
    %v391 = vld [vmem:[%s4 + $0x28] sm:$0xff]
    %v392 = vld [vmem:[%s4 + $0x30] sm:$0xff]
    %v393 = vld [vmem:[%s4 + $0x38] sm:$0xff]
    %v394 = vld [vmem:[%s4 + $0x40] sm:$0xff]
    %v395 = vld [vmem:[%s4 + $0x48] sm:$0xff]
    %v396 = vld [vmem:[%s4 + $0x50] sm:$0xff]
    %v397 = vld [vmem:[%s4 + $0x58] sm:$0xff]
    %v398 = vld [vmem:[%s4 + $0x60] sm:$0xff]
    %v399 = vld [vmem:[%s4 + $0x68] sm:$0xff]
    %v400 = vld [vmem:[%s4 + $0x70] sm:$0xff]
    %v401 = vld [vmem:[%s4 + $0x78] sm:$0xff]
    %v402 = vld [vmem:[%s4 + $0x80] sm:$0xff]
    %v403 = vld [vmem:[%s4 + $0x88] sm:$0xff]
    %v404 = vld [vmem:[%s4 + $0x90] sm:$0xff]
    %v405 = vld [vmem:[%s4 + $0x98] sm:$0xff]
    %v406 = vld [vmem:[%s4 + $0xa0] sm:$0xff]
    %v407 = vld [vmem:[%s4 + $0xa8] sm:$0xff]
    %v408 = vld [vmem:[%s4 + $0xb0] sm:$0xff]
    %v409 = vld [vmem:[%s4 + $0xb8] sm:$0xff]
    %v410 = vld [vmem:[%s4 + $0xc0] sm:$0xff]
    %v411 = vld [vmem:[%s4 + $0xc8] sm:$0xff]
    %v412 = vld [vmem:[%s4 + $0xd0] sm:$0xff]
    %v413 = vld [vmem:[%s4 + $0xd8] sm:$0xff]
    %v414 = vld [vmem:[%s4 + $0xe0] sm:$0xff]
    %v415 = vld [vmem:[%s4 + $0xe8] sm:$0xff]
    %v416 = vld [vmem:[%s4 + $0xf0] sm:$0xff]
    %v417 = vld [vmem:[%s4 + $0xf8] sm:$0xff]
    %v418 = vld [vmem:[%s4 + $0x100] sm:$0xff]
    %v419 = vld [vmem:[%s4 + $0x108] sm:$0xff]
    %v420 = vld [vmem:[%s4 + $0x110] sm:$0xff]
    %v421 = vld [vmem:[%s4 + $0x118] sm:$0xff]
    %v422 = vld [vmem:[%s4 + $0x120] sm:$0xff]
    %v423 = vld [vmem:[%s4 + $0x128] sm:$0xff]
    %v424 = vld [vmem:[%s4 + $0x130] sm:$0xff]
    %v425 = vld [vmem:[%s4 + $0x138] sm:$0xff]
    %v426 = vld [vmem:[%s4 + $0x140] sm:$0xff]
    %v427 = vld [vmem:[%s4 + $0x148] sm:$0xff]
    %v428 = vld [vmem:[%s4 + $0x150] sm:$0xff]
    %v429 = vld [vmem:[%s4 + $0x158] sm:$0xff]
    %v430 = vld [vmem:[%s4 + $0x160] sm:$0xff]
    %v431 = vld [vmem:[%s4 + $0x168] sm:$0xff]
    %v432 = vld [vmem:[%s4 + $0x170] sm:$0xff]
    %v433 = vld [vmem:[%s4 + $0x178] sm:$0xff]
    %v434 = vld [vmem:[%s4 + $0x180] sm:$0xff]
    %v435 = vld [vmem:[%s5] sm:$0x1]
    %v437 = vlaneseq
    %v438 = vshrl.u32 %v437, 7
    %v439 = vsub.s32 0, %v438
    %v440 = vrot.slane %v435, %v439
    %vm442 = vcmask 64512
    %v444 = vsel %vm442, %v377, 0
    %v447 = vsel %vm442, %v381, 0
    %v450 = vsel %vm442, %v385, 0
    %452 = vmatprep.subr.mxu0 0.0
    %453 = vmatpush1.msra.mxu0 %v386
    %454 = vmatprep.subr.mxu0 0.0
    %455 = vmatpush1.msra.mxu0 %v387
    %456 = vmatprep.subr.mxu0 0.0
    %457 = vmatpush1.msra.mxu0 %v388
    %458 = vmatprep.subr.mxu0 0.0
    %459 = vmatpush1.msra.mxu0 %v389
    %460 = vmatprep.subr.mxu0 0.0
    %461 = vmatpush1.msra.mxu0 %v390
    %462 = vmatprep.subr.mxu0 0.0
    %463 = vmatpush1.msra.mxu0 %v391
    %464 = vmatprep.subr.mxu0 0.0
    %465 = vmatpush1.msra.mxu0 %v392
    %466 = vmatprep.subr.mxu0 0.0
    %467 = vmatpush1.msra.mxu0 %v393
    %468 = vmatprep.subr.mxu0 0.0
    %469 = vmatpush1.msra.mxu0 %v394
    %470 = vmatprep.subr.mxu0 0.0
    %471 = vmatpush1.msra.mxu0 %v395
    %472 = vmatprep.subr.mxu0 0.0
    %473 = vmatpush1.msra.mxu0 %v396
    %474 = vmatprep.subr.mxu0 0.0
    %475 = vmatpush1.msra.mxu0 %v397
    %476 = vmatprep.subr.mxu0 0.0
    %477 = vmatpush1.msra.mxu0 %v398
    %478 = vmatprep.subr.mxu0 0.0
    %479 = vmatpush1.msra.mxu0 %v399
    %480 = vmatprep.subr.mxu0 0.0
    %481 = vmatpush1.msra.mxu0 %v400
    %482 = vmatprep.subr.mxu0 0.0
    %483 = vmatpush1.msra.mxu0 %v401
    %484 = vmatprep.subr.mxu0 0.0
    %485 = vmatpush1.msra.mxu0 %v402
    %486 = vmatprep.subr.mxu0 0.0
    %487 = vmatpush1.msra.mxu0 %v403
    %488 = vmatprep.subr.mxu0 0.0
    %489 = vmatpush1.msra.mxu0 %v404
    %490 = vmatprep.subr.mxu0 0.0
    %491 = vmatpush1.msra.mxu0 %v405
    %492 = vmatprep.subr.mxu0 0.0
    %493 = vmatpush1.msra.mxu0 %v406
    %494 = vmatprep.subr.mxu0 0.0
    %495 = vmatpush1.msra.mxu0 %v407
    %496 = vmatprep.subr.mxu0 0.0
    %497 = vmatpush1.msra.mxu0 %v408
    %498 = vmatprep.subr.mxu0 0.0
    %499 = vmatpush1.msra.mxu0 %v409
    %500 = vmatprep.subr.mxu0 0.0
    %501 = vmatpush1.msra.mxu0 %v410
    %502 = vmatprep.subr.mxu0 0.0
    %503 = vmatpush1.msra.mxu0 %v411
    %504 = vmatprep.subr.mxu0 0.0
    %505 = vmatpush1.msra.mxu0 %v412
    %506 = vmatprep.subr.mxu0 0.0
    %507 = vmatpush1.msra.mxu0 %v413
    %508 = vmatprep.subr.mxu0 0.0
    %509 = vmatpush1.msra.mxu0 %v414
    %510 = vmatprep.subr.mxu0 0.0
    %511 = vmatpush1.msra.mxu0 %v415
    %512 = vmatprep.subr.mxu0 0.0
    %513 = vmatpush1.msra.mxu0 %v416
    %514 = vmatprep.subr.mxu0 0.0
    %515 = vmatpush1.msra.mxu0 %v417
    %516 = vmatprep.mubr.f32.mxu0 %v375
    %517 = vmatmul.mubr.f32.gmra.mrb[0].mxu0 %v374
    %v518 = vpop.f32.mrb[0].mxu0
    %v519 = vadd.f32 %v440, %v518
    %v520 = vpop.f32.mrb[0].mxu0
    %521 = vmatprep.mubr.f32.mxu0 %v379
    %522 = vmatmul.mubr.f32.gmra.mrb[0].mxu0 %v378
    %v523 = vpop.f32.mrb[0].mxu0
    %v524 = vadd.f32 %v440, %v523
    %v525 = vpop.f32.mrb[0].mxu0
    %526 = vmatprep.mubr.f32.mxu0 %v383
    %527 = vmatmul.mubr.f32.gmra.mrb[0].mxu0 %v382
    %v528 = vpop.f32.mrb[0].mxu0
    %v529 = vadd.f32 %v440, %v528
    %v530 = vpop.f32.mrb[0].mxu0
    %531 = vdwg.mxu0
    %532 = vmatprep.subr.mxu0 0.0
    %533 = vmatpush1.msra.mxu0 %v418
    %534 = vmatprep.subr.mxu0 0.0
    %535 = vmatpush1.msra.mxu0 %v419
    %536 = vmatprep.subr.mxu0 0.0
    %537 = vmatpush1.msra.mxu0 %v420
    %538 = vmatprep.subr.mxu0 0.0
    %539 = vmatpush1.msra.mxu0 %v421
    %540 = vmatprep.subr.mxu0 0.0
    %541 = vmatpush1.msra.mxu0 %v422
    %542 = vmatprep.subr.mxu0 0.0
    %543 = vmatpush1.msra.mxu0 %v423
    %544 = vmatprep.subr.mxu0 0.0
    %545 = vmatpush1.msra.mxu0 %v424
    %546 = vmatprep.subr.mxu0 0.0
    %547 = vmatpush1.msra.mxu0 %v425
    %548 = vmatprep.subr.mxu0 0.0
    %549 = vmatpush1.msra.mxu0 %v426
    %550 = vmatprep.subr.mxu0 0.0
    %551 = vmatpush1.msra.mxu0 %v427
    %552 = vmatprep.subr.mxu0 0.0
    %553 = vmatpush1.msra.mxu0 %v428
    %554 = vmatprep.subr.mxu0 0.0
    %555 = vmatpush1.msra.mxu0 %v429
    %556 = vmatprep.subr.mxu0 0.0
    %557 = vmatpush1.msra.mxu0 %v430
    %558 = vmatprep.subr.mxu0 0.0
    %559 = vmatpush1.msra.mxu0 %v431
    %560 = vmatprep.subr.mxu0 0.0
    %561 = vmatpush1.msra.mxu0 %v432
    %562 = vmatprep.subr.mxu0 0.0
    %563 = vmatpush1.msra.mxu0 %v433
    %564 = vmatprep.subr.mxu0 0.0
    %565 = vmatpush1.msra.mxu0 %v434
    %566 = vmatprep.subr.mxu0 0.0
    %567 = vmatpush1.msra.mxu0 0.0
    %568 = vmatprep.subr.mxu0 0.0
    %569 = vmatpush1.msra.mxu0 0.0
    %570 = vmatprep.subr.mxu0 0.0
    %571 = vmatpush1.msra.mxu0 0.0
    %572 = vmatprep.subr.mxu0 0.0
    %573 = vmatpush1.msra.mxu0 0.0
    %574 = vmatprep.subr.mxu0 0.0
    %575 = vmatpush1.msra.mxu0 0.0
    %576 = vmatprep.subr.mxu0 0.0
    %577 = vmatpush1.msra.mxu0 0.0
    %578 = vmatprep.subr.mxu0 0.0
    %579 = vmatpush1.msra.mxu0 0.0
    %580 = vmatprep.subr.mxu0 0.0
    %581 = vmatpush1.msra.mxu0 0.0
    %582 = vmatprep.subr.mxu0 0.0
    %583 = vmatpush1.msra.mxu0 0.0
    %584 = vmatprep.subr.mxu0 0.0
    %585 = vmatpush1.msra.mxu0 0.0
    %586 = vmatprep.subr.mxu0 0.0
    %587 = vmatpush1.msra.mxu0 0.0
    %588 = vmatprep.subr.mxu0 0.0
    %589 = vmatpush1.msra.mxu0 0.0
    %590 = vmatprep.subr.mxu0 0.0
    %591 = vmatpush1.msra.mxu0 0.0
    %592 = vmatprep.subr.mxu0 0.0
    %593 = vmatpush1.msra.mxu0 0.0
    %594 = vmatprep.subr.mxu0 0.0
    %595 = vmatpush1.msra.mxu0 0.0
    %596 = vmatprep.mubr.f32.mxu0 %v444
    %597 = vmatmul.mubr.f32.gmra.mrb[0].mxu0 %v376
    %v598 = vpop.f32.mrb[0].mxu0
    %v599 = vadd.f32 %v519, %v598
    %v600 = vpop.f32.mrb[0].mxu0
    %601 = vmatprep.mubr.f32.mxu0 %v447
    %602 = vmatmul.mubr.f32.gmra.mrb[0].mxu0 %v380
    %v603 = vpop.f32.mrb[0].mxu0
    %v604 = vadd.f32 %v524, %v603
    %v605 = vpop.f32.mrb[0].mxu0
    %606 = vmatprep.mubr.f32.mxu0 %v450
    %607 = vmatmul.mubr.f32.gmra.mrb[0].mxu0 %v384
    %v608 = vpop.f32.mrb[0].mxu0
    %v609 = vadd.f32 %v529, %v608
    %v610 = vpop.f32.mrb[0].mxu0
    %611 = vdwg.mxu0
    %v612 = vmax.f32 %v599, 0.0
    %v613 = vmax.f32 %v604, 0.0
    %v614 = vmax.f32 %v609, 0.0
    %v615 = vld [vmem:[%s7] sm:$0x1]
    %v616 = vld [vmem:[%s6] sm:$0xff]
    %v617 = vld [vmem:[%s6 + $0x8] sm:$0xff]
    %v618 = vld [vmem:[%s6 + $0x10] sm:$0xff]
    %v619 = vld [vmem:[%s6 + $0x18] sm:$0xff]
    %v620 = vld [vmem:[%s6 + $0x20] sm:$0xff]
    %v621 = vld [vmem:[%s6 + $0x28] sm:$0xff]
    %v622 = vld [vmem:[%s6 + $0x30] sm:$0xff]
    %v623 = vld [vmem:[%s6 + $0x38] sm:$0xff]
    %v625 = vlaneseq
    %v626 = vshrl.u32 %v625, 7
    %v627 = vsub.s32 0, %v626
    %v628 = vrot.slane %v615, %v627
    %vm630 = vcmask 523264
    %v632 = vsel %vm630, %v612, 0
    %v635 = vsel %vm630, %v613, 0
    %v638 = vsel %vm630, %v614, 0
    %640 = vmatprep.subr.mxu0 0.0
    %641 = vmatpush1.msra.mxu0 %v616
    %642 = vmatprep.subr.mxu0 0.0
    %643 = vmatpush1.msra.mxu0 %v617
    %644 = vmatprep.subr.mxu0 0.0
    %645 = vmatpush1.msra.mxu0 %v618
    %646 = vmatprep.subr.mxu0 0.0
    %647 = vmatpush1.msra.mxu0 %v619
    %648 = vmatprep.subr.mxu0 0.0
    %649 = vmatpush1.msra.mxu0 %v620
    %650 = vmatprep.subr.mxu0 0.0
    %651 = vmatpush1.msra.mxu0 %v621
    %652 = vmatprep.subr.mxu0 0.0
    %653 = vmatpush1.msra.mxu0 %v622
    %654 = vmatprep.subr.mxu0 0.0
    %655 = vmatpush1.msra.mxu0 %v623
    %656 = vmatprep.subr.mxu0 0.0
    %657 = vmatpush1.msra.mxu0 0.0
    %658 = vmatprep.subr.mxu0 0.0
    %659 = vmatpush1.msra.mxu0 0.0
    %660 = vmatprep.subr.mxu0 0.0
    %661 = vmatpush1.msra.mxu0 0.0
    %662 = vmatprep.subr.mxu0 0.0
    %663 = vmatpush1.msra.mxu0 0.0
    %664 = vmatprep.subr.mxu0 0.0
    %665 = vmatpush1.msra.mxu0 0.0
    %666 = vmatprep.subr.mxu0 0.0
    %667 = vmatpush1.msra.mxu0 0.0
    %668 = vmatprep.subr.mxu0 0.0
    %669 = vmatpush1.msra.mxu0 0.0
    %670 = vmatprep.subr.mxu0 0.0
    %671 = vmatpush1.msra.mxu0 0.0
    %672 = vmatprep.subr.mxu0 0.0
    %673 = vmatpush1.msra.mxu0 0.0
    %674 = vmatprep.subr.mxu0 0.0
    %675 = vmatpush1.msra.mxu0 0.0
    %676 = vmatprep.subr.mxu0 0.0
    %677 = vmatpush1.msra.mxu0 0.0
    %678 = vmatprep.subr.mxu0 0.0
    %679 = vmatpush1.msra.mxu0 0.0
    %680 = vmatprep.subr.mxu0 0.0
    %681 = vmatpush1.msra.mxu0 0.0
    %682 = vmatprep.subr.mxu0 0.0
    %683 = vmatpush1.msra.mxu0 0.0
    %684 = vmatprep.subr.mxu0 0.0
    %685 = vmatpush1.msra.mxu0 0.0
    %686 = vmatprep.subr.mxu0 0.0
    %687 = vmatpush1.msra.mxu0 0.0
    %688 = vmatprep.subr.mxu0 0.0
    %689 = vmatpush1.msra.mxu0 0.0
    %690 = vmatprep.subr.mxu0 0.0
    %691 = vmatpush1.msra.mxu0 0.0
    %692 = vmatprep.subr.mxu0 0.0
    %693 = vmatpush1.msra.mxu0 0.0
    %694 = vmatprep.subr.mxu0 0.0
    %695 = vmatpush1.msra.mxu0 0.0
    %696 = vmatprep.subr.mxu0 0.0
    %697 = vmatpush1.msra.mxu0 0.0
    %698 = vmatprep.subr.mxu0 0.0
    %699 = vmatpush1.msra.mxu0 0.0
    %700 = vmatprep.subr.mxu0 0.0
    %701 = vmatpush1.msra.mxu0 0.0
    %702 = vmatprep.subr.mxu0 0.0
    %703 = vmatpush1.msra.mxu0 0.0
    %704 = vmatprep.mubr.f32.mxu0 0.0
    %705 = vmatmul.mubr.f32.gmra.mrb[0].mxu0 %v632
    %v706 = vpop.f32.mrb[0].mxu0
    %v707 = vadd.f32 %v628, %v706
    %v708 = vpop.f32.mrb[0].mxu0
    %709 = vmatprep.mubr.f32.mxu0 0.0
    %710 = vmatmul.mubr.f32.gmra.mrb[0].mxu0 %v635
    %v711 = vpop.f32.mrb[0].mxu0
    %v712 = vadd.f32 %v628, %v711
    %v713 = vpop.f32.mrb[0].mxu0
    %714 = vmatprep.mubr.f32.mxu0 0.0
    %715 = vmatmul.mubr.f32.gmra.mrb[0].mxu0 %v638
    %v716 = vpop.f32.mrb[0].mxu0
    %v717 = vadd.f32 %v628, %v716
    %v718 = vpop.f32.mrb[0].mxu0
    %719 = vdwg.mxu0
    %v720 = vlaneseq
    %v721 = vand.u32 %v720, 127
    %vm722 = vcmp.lt.s32.totalorder %v721, 16
    %v723 = vsel %vm722, 1, 0
    %v724 = vcvt.s32.f32 %v723
    %vm725 = vcmp.ge.s32.totalorder %v721, 16
    %vm726 = vcmp.lt.s32.totalorder %v721, 24
    %vm727 = vmand %vm725, %vm726
    %v728 = vsel %vm727, 1, 0
    %v729 = vcvt.s32.f32 %v728
    %v730 = vsub.f32 %v712, %v628
    %v731 = vsub.f32 %v717, %v628
    %v732 = vmul.f32 %v729, %v730
    %v733 = vmul.f32 %v729, %v731
    %v736 = vrot.slane %v732, 4
    %v737 = vrot.slane %v733, 4
    %v738 = vsel %vm45, %v736, %v737
    %v741 = vsub.f32 %v707, %v738
    %v742 = vsub.f32 %v712, %v737
    %743 = vst [vmem:[#allocation2] sm:$0xff] %v741
    %744 = vst [vmem:[#allocation2 + $0x8] sm:$0xf] %v742
    %v745 = vmul.f32 %v707, %v724
    %v746 = vmul.f32 %v712, %v724
    %v747 = vmul.f32 %v745, %v745
    %v748 = vmul.f32 %v746, %v746
    %749 = vmatprep.subr.mxu0 0.0
    %750 = vmatpush1.xpose.msra.mxu0 %v747
    %751 = vmatprep.subr.mxu0 0.0
    %752 = vmatpush1.xpose.msra.mxu0 %v748
    %753 = vmatprep.subr.mxu0 0.0
    %754 = vmatpush1.xpose.msra.mxu0 0.0
    %755 = vmatprep.subr.mxu0 0.0
    %756 = vmatpush1.xpose.msra.mxu0 0.0
    %757 = vmatprep.subr.mxu0 0.0
    %758 = vmatpush1.xpose.msra.mxu0 0.0
    %759 = vmatprep.subr.mxu0 0.0
    %760 = vmatpush1.xpose.msra.mxu0 0.0
    %761 = vmatprep.subr.mxu0 0.0
    %762 = vmatpush1.xpose.msra.mxu0 0.0
    %763 = vmatprep.subr.mxu0 0.0
    %764 = vmatpush1.xpose.msra.mxu0 0.0
    %765 = vmatprep.subr.mxu0 0.0
    %766 = vmatpush1.xpose.msra.mxu0 0.0
    %767 = vmatprep.subr.mxu0 0.0
    %768 = vmatpush1.xpose.msra.mxu0 0.0
    %769 = vmatprep.subr.mxu0 0.0
    %770 = vmatpush1.xpose.msra.mxu0 0.0
    %771 = vmatprep.subr.mxu0 0.0
    %772 = vmatpush1.xpose.msra.mxu0 0.0
    %773 = vmatprep.subr.mxu0 0.0
    %774 = vmatpush1.xpose.msra.mxu0 0.0
    %775 = vmatprep.subr.mxu0 0.0
    %776 = vmatpush1.xpose.msra.mxu0 0.0
    %777 = vmatprep.subr.mxu0 0.0
    %778 = vmatpush1.xpose.msra.mxu0 0.0
    %779 = vmatprep.subr.mxu0 0.0
    %780 = vmatpush1.xpose.msra.mxu0 0.0
    %781 = vmatprep.subr.mxu0 0.0
    %782 = vmatpush1.xpose.msra.mxu0 0.0
    %783 = vmatprep.subr.mxu0 0.0
    %784 = vmatpush1.xpose.msra.mxu0 0.0
    %785 = vmatprep.subr.mxu0 0.0
    %786 = vmatpush1.xpose.msra.mxu0 0.0
    %787 = vmatprep.subr.mxu0 0.0
    %788 = vmatpush1.xpose.msra.mxu0 0.0
    %789 = vmatprep.subr.mxu0 0.0
    %790 = vmatpush1.xpose.msra.mxu0 0.0
    %791 = vmatprep.subr.mxu0 0.0
    %792 = vmatpush1.xpose.msra.mxu0 0.0
    %793 = vmatprep.subr.mxu0 0.0
    %794 = vmatpush1.xpose.msra.mxu0 0.0
    %795 = vmatprep.subr.mxu0 0.0
    %796 = vmatpush1.xpose.msra.mxu0 0.0
    %797 = vmatprep.subr.mxu0 0.0
    %798 = vmatpush1.xpose.msra.mxu0 0.0
    %799 = vmatprep.subr.mxu0 0.0
    %800 = vmatpush1.xpose.msra.mxu0 0.0
    %801 = vmatprep.subr.mxu0 0.0
    %802 = vmatpush1.xpose.msra.mxu0 0.0
    %803 = vmatprep.subr.mxu0 0.0
    %804 = vmatpush1.xpose.msra.mxu0 0.0
    %805 = vmatprep.subr.mxu0 0.0
    %806 = vmatpush1.xpose.msra.mxu0 0.0
    %807 = vmatprep.subr.mxu0 0.0
    %808 = vmatpush1.xpose.msra.mxu0 0.0
    %809 = vmatprep.subr.mxu0 0.0
    %810 = vmatpush1.xpose.msra.mxu0 0.0
    %811 = vmatprep.subr.mxu0 0.0
    %812 = vmatpush1.xpose.msra.mxu0 0.0
    %813 = vmatprep.mubr.f32.mxu0 0.0
    %814 = vmatmul.mubr.f32.gmra.mrb[0].mxu0 1.0
    %v815 = vpop.f32.mrb[0].mxu0
    %v816 = vadd.f32 0.0, %v815
    %v817 = vpop.f32.mrb[0].mxu0
    %818 = vdwg.mxu0
    %vm819 = vcmask 90112
    %820 = vst.msk [vmem:[#allocation4] sm:$0x1] %vm819, %v816
    // Predicated region
    $region34: #{build_memory.1} parent=1 // pred_check
      _
    $region35: #{build_memory.1} parent=1 // pred_check_branch
      %822 = sbr.rel (0) target = $region37
    $region36: #{build_memory.1} parent=1 // pred_region
      %s824 = ssub.s32 256, 256
      %825 = vsyncadd [#allocation3], %s824
      %s826 = sshll.u32 [#allocation2], 4
      %s827 = int_to_ptr.vmem [resolvable:$true] %s826
      %832 = dma.vmem_to_hbm [thread:$0]  %s827, 256, %s8, [#allocation3], 128, 128, 8
    $region37: #{build_memory.1} parent=1 // pred_fallthru
      _
    // Predicated region
    $region38: #{build_memory.1} parent=1 // pred_check
      _
    $region39: #{build_memory.1} parent=1 // pred_check_branch
      %834 = sbr.rel (0) target = $region41
    $region40: #{build_memory.1} parent=1 // pred_region
      %s836 = ssub.s32 16, 16
      %837 = vsyncadd [#allocation5], %s836
      %s839 = sshll.u32 [#allocation4], 4
      %s840 = int_to_ptr.vmem [resolvable:$true] %s839
      %842 = dma.vmem_to_hbm [thread:$0]  %s840, 16, %s9, [#allocation5]
    $region41: #{build_memory.1} parent=1 // pred_fallthru
      _
    // Predicated region
    $region42: #{build_memory.1} parent=1 // pred_check
      _
    $region43: #{build_memory.1} parent=1 // pred_check_branch
      %844 = sbr.rel (0) target = $region45
    $region44: #{build_memory.1} parent=1 // pred_region
      %845 = dma.done [#allocation3], 256
    $region45: #{build_memory.1} parent=1 // pred_fallthru
      _
    // Predicated region
    $region46: #{build_memory.1} parent=1 // pred_check
      _
    $region47: #{build_memory.1} parent=1 // pred_check_branch
      %847 = sbr.rel (0) target = $region49
    $region48: #{build_memory.1} parent=1 // pred_region
      %848 = dma.done [#allocation5], 16
    $region49: #{build_memory.1} parent=1 // pred_fallthru
      _
    %849 = vsyncpa [#allocation3], 1
    %850 = vsyncpa [#allocation5], 1

</llo_original>
